<compile_context>
chip_gen: v6e
topology: v6e:2x2x1
jax: 0.10.0
libtpu: 0.0.40
codegen_flags: <defaults>
</compile_context>

<pallas_src>
import functools

import jax
import jax.numpy as jnp
from jax.experimental import pallas as pl
from jax.experimental.pallas import tpu as pltpu


def value_kernel(u_ref, p_ref, n_ref,
                 w1u_ref, w1p_ref, w1n_ref, b1_ref,
                 w2_ref, b2_ref, w3_ref, out_ref):
    # linear1 on the K-split state: state @ w1 == u@w1_u + p@w1_p + n@w1_n
    a = (jnp.dot(u_ref[...], w1u_ref[...], preferred_element_type=jnp.float32)
         + jnp.dot(p_ref[...], w1p_ref[...], preferred_element_type=jnp.float32)
         + jnp.dot(n_ref[...], w1n_ref[...], preferred_element_type=jnp.float32)
         + b1_ref[...])
    # b = relu(linear2(a))
    h = jnp.maximum(
        jnp.dot(a, w2_ref[...], preferred_element_type=jnp.float32) + b2_ref[...],
        0.0)
    # c = relu(linear3(b))  -- N=1 matmul done as VPU mul + lane reduction
    c = jnp.maximum(jnp.sum(h * w3_ref[...], axis=-1, keepdims=True), 0.0)
    # res = sigmoid(c); broadcast to a lane-dense (tm, 128) output block
    res = jax.nn.sigmoid(c)
    out_ref[...] = jnp.broadcast_to(res, out_ref.shape)


def _round_up(x, m):
    return ((x + m - 1) // m) * m


@functools.partial(jax.jit, static_argnames=("tm",))
def value_forward(user, pos_item, neg_item, params, *, tm=256):
    """Forward pass of Value.  user/pos_item/neg_item: (B, dim) f32 -> (B, 1)."""
    w1u, w1p, w1n, b1, w2, b2, w3_row = params
    B, dim = user.shape

    # Batch tile: multiple of 8 sublanes, <= 256 (MXU rows on v6e/v7x).
    tm = int(min(tm, _round_up(B, 8)))
    tm = _round_up(tm, 8)
    Bp = _round_up(B, tm)

    def pad(x):
        x = x.astype(jnp.float32)
        return jnp.pad(x, ((0, Bp - B), (0, 0))) if Bp != B else x

    u, p, n = pad(user), pad(pos_item), pad(neg_item)

    act_spec = pl.BlockSpec((tm, dim), lambda i: (i, 0))

    def resident(arr):
        # Full-array block, same block index every grid step -> stays in VMEM.
        return pl.BlockSpec(arr.shape, lambda i: (0, 0))

    out = pl.pallas_call(
        value_kernel,
        out_shape=jax.ShapeDtypeStruct((Bp, 128), jnp.float32),
        grid_spec=pltpu.PrefetchScalarGridSpec(
            num_scalar_prefetch=0,
            grid=(Bp // tm,),
            in_specs=[act_spec, act_spec, act_spec,
                      resident(w1u), resident(w1p), resident(w1n),
                      resident(b1), resident(w2), resident(b2),
                      resident(w3_row)],
            out_specs=pl.BlockSpec((tm, 128), lambda i: (i, 0)),
        ),
        compiler_params=pltpu.CompilerParams(
            dimension_semantics=("parallel",)),
    )(u, p, n, w1u, w1p, w1n, b1, w2, b2, w3_row)

    # Lane-dense padded output -> module's (B, 1) result.
    return out[:B, :1]


def init_params(key, dim):
    """Parameter init mirroring the module's __init__ shapes.

    linear1: (3*dim -> 256) + bias, xavier_uniform   (weight split into 3 K-chunks)
    linear2: (256   -> 128) + bias, xavier_uniform
    linear3: (128   -> 1),  no bias, xavier_uniform  (stored as a (1,128) row)
    Weights are stored transposed: (in_features, out_features).
    """
    k1, k2, k3, kb1, kb2 = jax.random.split(key, 5)

    def xavier(k, fan_in, fan_out):
        bound = jnp.sqrt(6.0 / (fan_in + fan_out))
        return jax.random.uniform(
            k, (fan_in, fan_out), jnp.float32, minval=-bound, maxval=bound)

    def bias_init(k, fan_in, fan_out):
        bound = 1.0 / jnp.sqrt(fan_in)
        return jax.random.uniform(
            k, (1, fan_out), jnp.float32, minval=-bound, maxval=bound)

    w1 = xavier(k1, 3 * dim, 256)
    w1u, w1p, w1n = w1[:dim], w1[dim:2 * dim], w1[2 * dim:]
    b1 = bias_init(kb1, 3 * dim, 256)
    w2 = xavier(k2, 256, 128)
    b2 = bias_init(kb2, 256, 128)
    w3 = xavier(k3, 128, 1)
    w3_row = w3.reshape(1, 128)
    return (w1u, w1p, w1n, b1, w2, b2, w3_row)


def value_reference(user, pos_item, neg_item, params):
    """Pure-JAX reference (unsplit weights, explicit concat)."""
    w1u, w1p, w1n, b1, w2, b2, w3_row = params
    w1 = jnp.concatenate([w1u, w1p, w1n], axis=0)
    state = jnp.concatenate([user, pos_item, neg_item], axis=1)
    a = state @ w1 + b1
    h = jax.nn.relu(a @ w2 + b2)
    c = jax.nn.relu(h @ w3_row.T)
    return jax.nn.sigmoid(c)


if __name__ == "__main__":
    key = jax.random.PRNGKey(0)
    k_u, k_p, k_n, k_params = jax.random.split(key, 4)

    user_dim = 32  # opt.user_dim
    params = init_params(k_params, user_dim)

    # Small demo batch; tm=8 exercises a 2-step batch grid with resident weights.
    batch = 16
    user = jax.random.normal(k_u, (batch, user_dim), jnp.float32)
    pos_item = jax.random.normal(k_p, (batch, user_dim), jnp.float32)
    neg_item = jax.random.normal(k_n, (batch, user_dim), jnp.float32)

    out = value_forward(user, pos_item, neg_item, params, tm=8)
    out = jax.block_until_ready(out)
    ref = value_reference(user, pos_item, neg_item, params)
    assert out.shape == (batch, 1), out.shape
    assert jnp.allclose(out, ref, atol=1e-5, rtol=1e-5), (out, ref)

    # Non-multiple-of-tile batch (exercises the padding path) with default tm.
    batch2 = 5
    u2, p2, n2 = user[:batch2], pos_item[:batch2], neg_item[:batch2]
    out2 = jax.block_until_ready(value_forward(u2, p2, n2, params))
    ref2 = value_reference(u2, p2, n2, params)
    assert out2.shape == (batch2, 1), out2.shape
    assert jnp.allclose(out2, ref2, atol=1e-5, rtol=1e-5), (out2, ref2)

    print("KERNEL_OK")
</pallas_src>

<mosaic_0001>
module attributes {stable_mosaic.version = 11 : i64} {
  func.func @value_kernel(%arg0: i32, %arg1: memref<8x32xf32, #tpu.memory_space<vmem>>, %arg2: memref<8x32xf32, #tpu.memory_space<vmem>>, %arg3: memref<8x32xf32, #tpu.memory_space<vmem>>, %arg4: memref<32x256xf32, #tpu.memory_space<vmem>>, %arg5: memref<32x256xf32, #tpu.memory_space<vmem>>, %arg6: memref<32x256xf32, #tpu.memory_space<vmem>>, %arg7: memref<1x256xf32, #tpu.memory_space<vmem>>, %arg8: memref<256x128xf32, #tpu.memory_space<vmem>>, %arg9: memref<1x128xf32, #tpu.memory_space<vmem>>, %arg10: memref<1x128xf32, #tpu.memory_space<vmem>>, %arg11: memref<8x128xf32, #tpu.memory_space<vmem>>) attributes {dimension_semantics = [#tpu.dimension_semantics<parallel>], iteration_bounds = array<i64: 2>, scalar_prefetch = 0 : i64, scratch_operands = 0 : i64, tpu.core_type = #tpu.core_type<tc>, window_params = [{transform_indices = @transform_0, window_bounds = array<i64: 8, 32>}, {transform_indices = @transform_1, window_bounds = array<i64: 8, 32>}, {transform_indices = @transform_2, window_bounds = array<i64: 8, 32>}, {pipeline_mode = #tpu.pipeline_mode<synchronous>, transform_indices = @transform_3, window_bounds = array<i64: 32, 256>}, {pipeline_mode = #tpu.pipeline_mode<synchronous>, transform_indices = @transform_4, window_bounds = array<i64: 32, 256>}, {pipeline_mode = #tpu.pipeline_mode<synchronous>, transform_indices = @transform_5, window_bounds = array<i64: 32, 256>}, {pipeline_mode = #tpu.pipeline_mode<synchronous>, transform_indices = @transform_6, window_bounds = array<i64: 1, 256>}, {pipeline_mode = #tpu.pipeline_mode<synchronous>, transform_indices = @transform_7, window_bounds = array<i64: 256, 128>}, {pipeline_mode = #tpu.pipeline_mode<synchronous>, transform_indices = @transform_8, window_bounds = array<i64: 1, 128>}, {pipeline_mode = #tpu.pipeline_mode<synchronous>, transform_indices = @transform_9, window_bounds = array<i64: 1, 128>}, {transform_indices = @transform_10, window_bounds = array<i64: 8, 128>}]} {
    %c0 = arith.constant 0 : index
    %c0_0 = arith.constant 0 : index
    %0 = vector.load %arg1[%c0, %c0_0] : memref<8x32xf32, #tpu.memory_space<vmem>>, vector<8x32xf32>
    %c0_1 = arith.constant 0 : index
    %c0_2 = arith.constant 0 : index
    %1 = vector.load %arg4[%c0_1, %c0_2] : memref<32x256xf32, #tpu.memory_space<vmem>>, vector<32x256xf32>
    %cst = arith.constant dense<0.000000e+00> : vector<8x256xf32>
    %2 = tpu.matmul %0, %1, %cst {dimension_numbers = #tpu.dot_dimension_numbers<[1], [0], [0], [1], [0, 0, 1, 1], [], []>} : vector<8x32xf32>, vector<32x256xf32>, vector<8x256xf32> -> vector<8x256xf32>
    %c0_3 = arith.constant 0 : index
    %c0_4 = arith.constant 0 : index
    %3 = vector.load %arg2[%c0_3, %c0_4] : memref<8x32xf32, #tpu.memory_space<vmem>>, vector<8x32xf32>
    %c0_5 = arith.constant 0 : index
    %c0_6 = arith.constant 0 : index
    %4 = vector.load %arg5[%c0_5, %c0_6] : memref<32x256xf32, #tpu.memory_space<vmem>>, vector<32x256xf32>
    %cst_7 = arith.constant dense<0.000000e+00> : vector<8x256xf32>
    %5 = tpu.matmul %3, %4, %cst_7 {dimension_numbers = #tpu.dot_dimension_numbers<[1], [0], [0], [1], [0, 0, 1, 1], [], []>} : vector<8x32xf32>, vector<32x256xf32>, vector<8x256xf32> -> vector<8x256xf32>
    %6 = arith.addf %2, %5 : vector<8x256xf32>
    %c0_8 = arith.constant 0 : index
    %c0_9 = arith.constant 0 : index
    %7 = vector.load %arg3[%c0_8, %c0_9] : memref<8x32xf32, #tpu.memory_space<vmem>>, vector<8x32xf32>
    %c0_10 = arith.constant 0 : index
    %c0_11 = arith.constant 0 : index
    %8 = vector.load %arg6[%c0_10, %c0_11] : memref<32x256xf32, #tpu.memory_space<vmem>>, vector<32x256xf32>
    %cst_12 = arith.constant dense<0.000000e+00> : vector<8x256xf32>
    %9 = tpu.matmul %7, %8, %cst_12 {dimension_numbers = #tpu.dot_dimension_numbers<[1], [0], [0], [1], [0, 0, 1, 1], [], []>} : vector<8x32xf32>, vector<32x256xf32>, vector<8x256xf32> -> vector<8x256xf32>
    %10 = arith.addf %6, %9 : vector<8x256xf32>
    %c0_13 = arith.constant 0 : index
    %c0_14 = arith.constant 0 : index
    %11 = vector.load %arg7[%c0_13, %c0_14] : memref<1x256xf32, #tpu.memory_space<vmem>>, vector<1x256xf32>
    %12 = vector.broadcast %11 : vector<1x256xf32> to vector<8x256xf32>
    %13 = arith.addf %10, %12 : vector<8x256xf32>
    %c0_15 = arith.constant 0 : index
    %c0_16 = arith.constant 0 : index
    %14 = vector.load %arg8[%c0_15, %c0_16] : memref<256x128xf32, #tpu.memory_space<vmem>>, vector<256x128xf32>
    %cst_17 = arith.constant dense<0.000000e+00> : vector<8x128xf32>
    %15 = tpu.matmul %13, %14, %cst_17 {dimension_numbers = #tpu.dot_dimension_numbers<[1], [0], [0], [1], [0, 0, 1, 1], [], []>} : vector<8x256xf32>, vector<256x128xf32>, vector<8x128xf32> -> vector<8x128xf32>
    %c0_18 = arith.constant 0 : index
    %c0_19 = arith.constant 0 : index
    %16 = vector.load %arg9[%c0_18, %c0_19] : memref<1x128xf32, #tpu.memory_space<vmem>>, vector<1x128xf32>
    %17 = vector.broadcast %16 : vector<1x128xf32> to vector<8x128xf32>
    %18 = arith.addf %15, %17 : vector<8x128xf32>
    %cst_20 = arith.constant 0.000000e+00 : f32
    %19 = vector.broadcast %cst_20 : f32 to vector<8x128xf32>
    %20 = arith.maximumf %18, %19 : vector<8x128xf32>
    %c0_21 = arith.constant 0 : index
    %c0_22 = arith.constant 0 : index
    %21 = vector.load %arg10[%c0_21, %c0_22] : memref<1x128xf32, #tpu.memory_space<vmem>>, vector<1x128xf32>
    %22 = vector.broadcast %21 : vector<1x128xf32> to vector<8x128xf32>
    %23 = arith.mulf %20, %22 : vector<8x128xf32>
    %cst_23 = arith.constant dense<0.000000e+00> : vector<8xf32>
    %24 = vector.multi_reduction <add>, %23, %cst_23 [1] : vector<8x128xf32> to vector<8xf32>
    %25 = vector.shape_cast %24 : vector<8xf32> to vector<8x1xf32>
    %cst_24 = arith.constant 0.000000e+00 : f32
    %26 = vector.broadcast %cst_24 : f32 to vector<8x1xf32>
    %27 = arith.maximumf %25, %26 : vector<8x1xf32>
    %28 = arith.negf %27 : vector<8x1xf32>
    %29 = math.exp %28 : vector<8x1xf32>
    %cst_25 = arith.constant 1.000000e+00 : f32
    %30 = vector.broadcast %cst_25 : f32 to vector<8x1xf32>
    %31 = arith.addf %30, %29 : vector<8x1xf32>
    %32 = arith.divf %30, %31 : vector<8x1xf32>
    %33 = vector.shape_cast %32 : vector<8x1xf32> to vector<8x1xf32>
    %34 = vector.broadcast %33 : vector<8x1xf32> to vector<8x128xf32>
    %c0_26 = arith.constant 0 : index
    %c0_27 = arith.constant 0 : index
    %35 = vector.load %arg11[%c0_26, %c0_27] : memref<8x128xf32, #tpu.memory_space<vmem>>, vector<8x128xf32>
    tpu.vector_store %arg11[%c0_26, %c0_27], %34 {strides = array<i32>} : memref<8x128xf32, #tpu.memory_space<vmem>>, vector<8x128xf32>,
    return
  }
  func.func @transform_0(%arg0: i32) -> (i32, i32) {
    %c0_i32 = arith.constant 0 : i32
    %c0_i32_0 = arith.constant 0 : i32
    return %arg0, %c0_i32 : i32, i32
  }
  func.func @transform_1(%arg0: i32) -> (i32, i32) {
    %c0_i32 = arith.constant 0 : i32
    %c0_i32_0 = arith.constant 0 : i32
    return %arg0, %c0_i32 : i32, i32
  }
  func.func @transform_2(%arg0: i32) -> (i32, i32) {
    %c0_i32 = arith.constant 0 : i32
    %c0_i32_0 = arith.constant 0 : i32
    return %arg0, %c0_i32 : i32, i32
  }
  func.func @transform_3(%arg0: i32) -> (i32, i32) {
    %c0_i32 = arith.constant 0 : i32
    %c0_i32_0 = arith.constant 0 : i32
    %c0_i32_1 = arith.constant 0 : i32
    return %c0_i32, %c0_i32_0 : i32, i32
  }
  func.func @transform_4(%arg0: i32) -> (i32, i32) {
    %c0_i32 = arith.constant 0 : i32
    %c0_i32_0 = arith.constant 0 : i32
    %c0_i32_1 = arith.constant 0 : i32
    return %c0_i32, %c0_i32_0 : i32, i32
  }
  func.func @transform_5(%arg0: i32) -> (i32, i32) {
    %c0_i32 = arith.constant 0 : i32
    %c0_i32_0 = arith.constant 0 : i32
    %c0_i32_1 = arith.constant 0 : i32
    return %c0_i32, %c0_i32_0 : i32, i32
  }
  func.func @transform_6(%arg0: i32) -> (i32, i32) {
    %c0_i32 = arith.constant 0 : i32
    %c0_i32_0 = arith.constant 0 : i32
    %c0_i32_1 = arith.constant 0 : i32
    return %c0_i32, %c0_i32_0 : i32, i32
  }
  func.func @transform_7(%arg0: i32) -> (i32, i32) {
    %c0_i32 = arith.constant 0 : i32
    %c0_i32_0 = arith.constant 0 : i32
    %c0_i32_1 = arith.constant 0 : i32
    return %c0_i32, %c0_i32_0 : i32, i32
  }
  func.func @transform_8(%arg0: i32) -> (i32, i32) {
    %c0_i32 = arith.constant 0 : i32
    %c0_i32_0 = arith.constant 0 : i32
    %c0_i32_1 = arith.constant 0 : i32
    return %c0_i32, %c0_i32_0 : i32, i32
  }
  func.func @transform_9(%arg0: i32) -> (i32, i32) {
    %c0_i32 = arith.constant 0 : i32
    %c0_i32_0 = arith.constant 0 : i32
    %c0_i32_1 = arith.constant 0 : i32
    return %c0_i32, %c0_i32_0 : i32, i32
  }
  func.func @transform_10(%arg0: i32) -> (i32, i32) {
    %c0_i32 = arith.constant 0 : i32
    %c0_i32_0 = arith.constant 0 : i32
    return %arg0, %c0_i32 : i32, i32
  }
}

</mosaic_0001>

<llo_original>
// kernel: value_forward.1
$region0: #{value_forward.1}
  #allocation0 [shape = 'u32[]', space=smem, size = 0x4, offset = 0x4, fixed_abs, tag = 'smem constant byte address 0x4 - core index']
  #allocation1 [shape = 'u32[144,128]{1,0:T(1,128)}', space=vmem, size = 0x12000, scoped, tag = 'internal scratch']
  %s0 = inlined_call_operand.hbm [shape: f32[16,32], index: 0, kind: input, shape index: {}]
  %s1 = inlined_call_operand.hbm [shape: f32[16,32], index: 1, kind: input, shape index: {}]
  %s2 = inlined_call_operand.hbm [shape: f32[16,32], index: 2, kind: input, shape index: {}]
  %s3 = inlined_call_operand.hbm [shape: f32[32,256], index: 3, kind: input, shape index: {}]
  %s4 = inlined_call_operand.hbm [shape: f32[32,256], index: 4, kind: input, shape index: {}]
  %s5 = inlined_call_operand.hbm [shape: f32[32,256], index: 5, kind: input, shape index: {}]
  %s6 = inlined_call_operand.vmem [shape: f32[1,256], index: 6, kind: input, shape index: {}]
  %s7 = inlined_call_operand.hbm [shape: f32[256,128], index: 7, kind: input, shape index: {}]
  %s8 = inlined_call_operand.vmem [shape: f32[1,128], index: 8, kind: input, shape index: {}]
  %s9 = inlined_call_operand.vmem [shape: f32[1,128], index: 9, kind: input, shape index: {}]
  %s10 = inlined_call_operand.vmem [shape: f32[16,128], index: 10, kind: output, shape index: {}]
  %s11 = sld [smem:[#allocation0]]
  $region101: #{value_forward.1} parent=0
    _
  %s13 = ssub.s32 1, %s11
  %s14 = scalar_select 0, %s13, %s11
  $region1: #{value_forward.1} parent=0
    #allocation2 [shape = 'u8[8192]{0}', space=vmem, size = 0x2000, scoped, tag = 'input window, operand 0']
    #allocation3 [shape = 's32[2]{0}', space=sflag, size = 0x8, scoped, tag = 'scoped memory for value_forward.1']
    #allocation4 [shape = 'u8[8192]{0}', space=vmem, size = 0x2000, scoped, tag = 'input window, operand 1']
    #allocation5 [shape = 's32[2]{0}', space=sflag, size = 0x8, scoped, tag = 'scoped memory for value_forward.1']
    #allocation6 [shape = 'u8[8192]{0}', space=vmem, size = 0x2000, scoped, tag = 'input window, operand 2']
    #allocation7 [shape = 'u8[32768]{0}', space=vmem, size = 0x8000, scoped, tag = 'input window, operand 3, single buffered']
    #allocation8 [shape = 's32[1]{0}', space=sflag, size = 0x4, scoped, tag = 'scoped memory for value_forward.1']
    #allocation9 [shape = 'u8[32768]{0}', space=vmem, size = 0x8000, scoped, tag = 'input window, operand 4, single buffered']
    #allocation10 [shape = 'u8[32768]{0}', space=vmem, size = 0x8000, scoped, tag = 'input window, operand 5, single buffered']
    #allocation11 [shape = 's32[1]{0}', space=sflag, size = 0x4, scoped, tag = 'scoped memory for value_forward.1']
    #allocation12 [shape = 'u8[131072]{0}', space=vmem, size = 0x20000, scoped, tag = 'input window, operand 7, single buffered']
    %15 = vsyncpa [#allocation3], 0
    %s16 = scalar_lea.sflag [#allocation3], 1
    %17 = vsyncpa %s16, 0
    %18 = vsyncpa [#allocation5], 0
    %s19 = scalar_lea.sflag [#allocation5], 1
    %20 = vsyncpa %s19, 0
    %21 = vsyncpa [#allocation8], 0
    %22 = vsyncpa [#allocation11], 0
    loop: start=0, step=1, limit=4
    $region2: #{value_forward.1} parent=1 // loop_pre_header
      _
    $region3: #{value_forward.1} parent=1 // loop_header
      %s24 = sphi 0, %s28
      %p25 = scmp.ge.s32.totalorder %s24, 4
      %s34 = sphi 0, %s36
      %s37 = sphi 0, %s34
      %s38 = sphi 0, %s37
      %s54 = sphi 0, %s38
      %s60 = sphi 0, %s62
      %s63 = sphi 0, %s60
      %s64 = sphi 0, %s63
      %s80 = sphi 0, %s64
      %s86 = sphi 0, %s88
      %s89 = sphi 0, %s86
      %s90 = sphi 0, %s89
      %s106 = sphi 0, %s90
      %s110 = sphi 0, %s110
      %s112 = sphi 0, %s110
      %s113 = sphi 0, %s112
      %s127 = sphi 0, %s113
      %s131 = sphi 0, %s131
      %s133 = sphi 0, %s131
      %s134 = sphi 0, %s133
      %s148 = sphi 0, %s134
      %s152 = sphi 0, %s152
      %s154 = sphi 0, %s152
      %s155 = sphi 0, %s154
      %s169 = sphi 0, %s155
      %s173 = sphi 0, %s173
      %s175 = sphi 0, %s173
      %s176 = sphi 0, %s175
      %s190 = sphi 0, %s176
      %s194 = sphi 0, %s194
      %s196 = sphi 0, %s194
      %s197 = sphi 0, %s196
      %s211 = sphi 0, %s197
      %s215 = sphi 0, %s215
      %s217 = sphi 0, %s215
      %s218 = sphi 0, %s217
      %s232 = sphi 0, %s218
      %s236 = sphi 0, %s236
      %s238 = sphi 0, %s236
      %s239 = sphi 0, %s238
      %s253 = sphi 0, %s239
      %s259 = sphi 0, %s261
      %s262 = sphi 0, %s259
      %s263 = sphi 0, %s262
      %s279 = sphi 0, %s263
    $region4: #{value_forward.1} parent=1 // loop_header_branch
      %27 = sbr.rel (%p25) target = $region8
    $region5: #{value_forward.1} parent=1 // loop_body
      %s29 = ssub.s32 %s24, 1
      %s30 = ssub.s32 %s24, 2
      %s31 = sadd.s32 %s24, 1
      %s32 = ssub.s32 %s24, %s31
      %p33 = scmp.eq.s32.totalorder %s32, 0
      %s35 = sadd.s32 %s34, 1
      %s36 = scalar_select %p33, %s34, %s35
      %p39 = pneg %p33
      %p40 = scmp.eq.s32.totalorder %s24, 1
      %p41 = por %p39, %p40
      %p42 = scmp.ne.s32.totalorder %s34, %s37
      %p43 = scmp.eq.s32.totalorder %s24, 0
      %p44 = por %p42, %p43
      %p45 = scmp.ne.s32.totalorder %s34, %s37
      %p46 = scmp.eq.s32.totalorder %s29, 1
      %p47 = por %p45, %p46
      %p48 = scmp.ne.s32.totalorder %s37, %s38
      %p49 = scmp.eq.s32.totalorder %s29, 0
      %p50 = por %p48, %p49
      %p51 = scmp.ne.s32.totalorder %s37, %s38
      %p52 = scmp.eq.s32.totalorder %s30, 1
      %p53 = por %p51, %p52
      %p55 = scmp.ne.s32.totalorder %s38, %s54
      %p56 = scmp.eq.s32.totalorder %s30, 0
      %p57 = por %p55, %p56
      %s58 = ssub.s32 %s24, %s31
      %p59 = scmp.eq.s32.totalorder %s58, 0
      %s61 = sadd.s32 %s60, 1
      %s62 = scalar_select %p59, %s60, %s61
      %p65 = pneg %p59
      %p66 = scmp.eq.s32.totalorder %s24, 1
      %p67 = por %p65, %p66
      %p68 = scmp.ne.s32.totalorder %s60, %s63
      %p69 = scmp.eq.s32.totalorder %s24, 0
      %p70 = por %p68, %p69
      %p71 = scmp.ne.s32.totalorder %s60, %s63
      %p72 = scmp.eq.s32.totalorder %s29, 1
      %p73 = por %p71, %p72
      %p74 = scmp.ne.s32.totalorder %s63, %s64
      %p75 = scmp.eq.s32.totalorder %s29, 0
      %p76 = por %p74, %p75
      %p77 = scmp.ne.s32.totalorder %s63, %s64
      %p78 = scmp.eq.s32.totalorder %s30, 1
      %p79 = por %p77, %p78
      %p81 = scmp.ne.s32.totalorder %s64, %s80
      %p82 = scmp.eq.s32.totalorder %s30, 0
      %p83 = por %p81, %p82
      %s84 = ssub.s32 %s24, %s31
      %p85 = scmp.eq.s32.totalorder %s84, 0
      %s87 = sadd.s32 %s86, 1
      %s88 = scalar_select %p85, %s86, %s87
      %p91 = pneg %p85
      %p92 = scmp.eq.s32.totalorder %s24, 1
      %p93 = por %p91, %p92
      %p94 = scmp.ne.s32.totalorder %s86, %s89
      %p95 = scmp.eq.s32.totalorder %s24, 0
      %p96 = por %p94, %p95
      %p97 = scmp.ne.s32.totalorder %s86, %s89
      %p98 = scmp.eq.s32.totalorder %s29, 1
      %p99 = por %p97, %p98
      %p100 = scmp.ne.s32.totalorder %s89, %s90
      %p101 = scmp.eq.s32.totalorder %s29, 0
      %p102 = por %p100, %p101
      %p103 = scmp.ne.s32.totalorder %s89, %s90
      %p104 = scmp.eq.s32.totalorder %s30, 1
      %p105 = por %p103, %p104
      %p107 = scmp.ne.s32.totalorder %s90, %s106
      %p108 = scmp.eq.s32.totalorder %s30, 0
      %p109 = por %p107, %p108
      %s111 = sadd.s32 %s110, 1
      %p114 = scmp.eq.s32.totalorder %s24, 1
      %p115 = scmp.ne.s32.totalorder %s110, %s112
      %p116 = scmp.eq.s32.totalorder %s24, 0
      %p117 = por %p115, %p116
      %p118 = scmp.ne.s32.totalorder %s110, %s112
      %p119 = scmp.eq.s32.totalorder %s29, 1
      %p120 = por %p118, %p119
      %p121 = scmp.ne.s32.totalorder %s112, %s113
      %p122 = scmp.eq.s32.totalorder %s29, 0
      %p123 = por %p121, %p122
      %p124 = scmp.ne.s32.totalorder %s112, %s113
      %p125 = scmp.eq.s32.totalorder %s30, 1
      %p126 = por %p124, %p125
      %p128 = scmp.ne.s32.totalorder %s113, %s127
      %p129 = scmp.eq.s32.totalorder %s30, 0
      %p130 = por %p128, %p129
      %s132 = sadd.s32 %s131, 1
      %p135 = scmp.eq.s32.totalorder %s24, 1
      %p136 = scmp.ne.s32.totalorder %s131, %s133
      %p137 = scmp.eq.s32.totalorder %s24, 0
      %p138 = por %p136, %p137
      %p139 = scmp.ne.s32.totalorder %s131, %s133
      %p140 = scmp.eq.s32.totalorder %s29, 1
      %p141 = por %p139, %p140
      %p142 = scmp.ne.s32.totalorder %s133, %s134
      %p143 = scmp.eq.s32.totalorder %s29, 0
      %p144 = por %p142, %p143
      %p145 = scmp.ne.s32.totalorder %s133, %s134
      %p146 = scmp.eq.s32.totalorder %s30, 1
      %p147 = por %p145, %p146
      %p149 = scmp.ne.s32.totalorder %s134, %s148
      %p150 = scmp.eq.s32.totalorder %s30, 0
      %p151 = por %p149, %p150
      %s153 = sadd.s32 %s152, 1
      %p156 = scmp.eq.s32.totalorder %s24, 1
      %p157 = scmp.ne.s32.totalorder %s152, %s154
      %p158 = scmp.eq.s32.totalorder %s24, 0
      %p159 = por %p157, %p158
      %p160 = scmp.ne.s32.totalorder %s152, %s154
      %p161 = scmp.eq.s32.totalorder %s29, 1
      %p162 = por %p160, %p161
      %p163 = scmp.ne.s32.totalorder %s154, %s155
      %p164 = scmp.eq.s32.totalorder %s29, 0
      %p165 = por %p163, %p164
      %p166 = scmp.ne.s32.totalorder %s154, %s155
      %p167 = scmp.eq.s32.totalorder %s30, 1
      %p168 = por %p166, %p167
      %p170 = scmp.ne.s32.totalorder %s155, %s169
      %p171 = scmp.eq.s32.totalorder %s30, 0
      %p172 = por %p170, %p171
      %s174 = sadd.s32 %s173, 1
      %p177 = scmp.eq.s32.totalorder %s24, 1
      %p178 = scmp.ne.s32.totalorder %s173, %s175
      %p179 = scmp.eq.s32.totalorder %s24, 0
      %p180 = por %p178, %p179
      %p181 = scmp.ne.s32.totalorder %s173, %s175
      %p182 = scmp.eq.s32.totalorder %s29, 1
      %p183 = por %p181, %p182
      %p184 = scmp.ne.s32.totalorder %s175, %s176
      %p185 = scmp.eq.s32.totalorder %s29, 0
      %p186 = por %p184, %p185
      %p187 = scmp.ne.s32.totalorder %s175, %s176
      %p188 = scmp.eq.s32.totalorder %s30, 1
      %p189 = por %p187, %p188
      %p191 = scmp.ne.s32.totalorder %s176, %s190
      %p192 = scmp.eq.s32.totalorder %s30, 0
      %p193 = por %p191, %p192
      %s195 = sadd.s32 %s194, 1
      %p198 = scmp.eq.s32.totalorder %s24, 1
      %p199 = scmp.ne.s32.totalorder %s194, %s196
      %p200 = scmp.eq.s32.totalorder %s24, 0
      %p201 = por %p199, %p200
      %p202 = scmp.ne.s32.totalorder %s194, %s196
      %p203 = scmp.eq.s32.totalorder %s29, 1
      %p204 = por %p202, %p203
      %p205 = scmp.ne.s32.totalorder %s196, %s197
      %p206 = scmp.eq.s32.totalorder %s29, 0
      %p207 = por %p205, %p206
      %p208 = scmp.ne.s32.totalorder %s196, %s197
      %p209 = scmp.eq.s32.totalorder %s30, 1
      %p210 = por %p208, %p209
      %p212 = scmp.ne.s32.totalorder %s197, %s211
      %p213 = scmp.eq.s32.totalorder %s30, 0
      %p214 = por %p212, %p213
      %s216 = sadd.s32 %s215, 1
      %p219 = scmp.eq.s32.totalorder %s24, 1
      %p220 = scmp.ne.s32.totalorder %s215, %s217
      %p221 = scmp.eq.s32.totalorder %s24, 0
      %p222 = por %p220, %p221
      %p223 = scmp.ne.s32.totalorder %s215, %s217
      %p224 = scmp.eq.s32.totalorder %s29, 1
      %p225 = por %p223, %p224
      %p226 = scmp.ne.s32.totalorder %s217, %s218
      %p227 = scmp.eq.s32.totalorder %s29, 0
      %p228 = por %p226, %p227
      %p229 = scmp.ne.s32.totalorder %s217, %s218
      %p230 = scmp.eq.s32.totalorder %s30, 1
      %p231 = por %p229, %p230
      %p233 = scmp.ne.s32.totalorder %s218, %s232
      %p234 = scmp.eq.s32.totalorder %s30, 0
      %p235 = por %p233, %p234
      %s237 = sadd.s32 %s236, 1
      %p240 = scmp.eq.s32.totalorder %s24, 1
      %p241 = scmp.ne.s32.totalorder %s236, %s238
      %p242 = scmp.eq.s32.totalorder %s24, 0
      %p243 = por %p241, %p242
      %p244 = scmp.ne.s32.totalorder %s236, %s238
      %p245 = scmp.eq.s32.totalorder %s29, 1
      %p246 = por %p244, %p245
      %p247 = scmp.ne.s32.totalorder %s238, %s239
      %p248 = scmp.eq.s32.totalorder %s29, 0
      %p249 = por %p247, %p248
      %p250 = scmp.ne.s32.totalorder %s238, %s239
      %p251 = scmp.eq.s32.totalorder %s30, 1
      %p252 = por %p250, %p251
      %p254 = scmp.ne.s32.totalorder %s239, %s253
      %p255 = scmp.eq.s32.totalorder %s30, 0
      %p256 = por %p254, %p255
      %s257 = ssub.s32 %s24, %s31
      %p258 = scmp.eq.s32.totalorder %s257, 0
      %s260 = sadd.s32 %s259, 1
      %s261 = scalar_select %p258, %s259, %s260
      %p264 = pneg %p258
      %p265 = scmp.eq.s32.totalorder %s24, 1
      %p266 = por %p264, %p265
      %p267 = scmp.ne.s32.totalorder %s259, %s262
      %p268 = scmp.eq.s32.totalorder %s24, 0
      %p269 = por %p267, %p268
      %p270 = scmp.ne.s32.totalorder %s259, %s262
      %p271 = scmp.eq.s32.totalorder %s29, 1
      %p272 = por %p270, %p271
      %p273 = scmp.ne.s32.totalorder %s262, %s263
      %p274 = scmp.eq.s32.totalorder %s29, 0
      %p275 = por %p273, %p274
      %p276 = scmp.ne.s32.totalorder %s262, %s263
      %p277 = scmp.eq.s32.totalorder %s30, 1
      %p278 = por %p276, %p277
      %p280 = scmp.ne.s32.totalorder %s263, %s279
      %p281 = scmp.eq.s32.totalorder %s30, 0
      %p282 = por %p280, %p281
      %p283 = scmp.le.s32.totalorder 1, %s24
      %p284 = scmp.lt.s32.totalorder %s24, 3
      %p285 = pnand %p283, %p284
      %p286 = pneg %p285
      // Predicated region
      $region9: #{value_forward.1} parent=5 // pred_check
        _
      $region10: #{value_forward.1} parent=5 // pred_check_branch
        %288 = sbr.rel (%p285) target = $region12
      $region11: #{value_forward.1} parent=5 // pred_region
        %s289 = ssub.s32 %s24, 1
        // Predicated region
        $region13: #{value_forward.1} parent=11 // pred_check
          %p290 = pneg %p123
        $region14: #{value_forward.1} parent=11 // pred_check_branch
          %292 = sbr.rel (%p290) target = $region16
        $region15: #{value_forward.1} parent=11 // pred_region
          %s294 = ssub.s32 1024, 1024
          %295 = vsyncadd [#allocation8], %s294
          %s296 = sshll.u32 [#allocation7], 4
          %s297 = int_to_ptr.vmem [resolvable:$true] %s296
          %302 = dma.hbm_to_vmem [thread:$0]  %s3, 1024, %s297, [#allocation8], 256, 256, 16
        $region16: #{value_forward.1} parent=11 // pred_fallthru
          _
        // Predicated region
        $region17: #{value_forward.1} parent=11 // pred_check
          %p303 = pneg %p144
        $region18: #{value_forward.1} parent=11 // pred_check_branch
          %305 = sbr.rel (%p303) target = $region20
        $region19: #{value_forward.1} parent=11 // pred_region
          %s307 = ssub.s32 1024, 1024
          %308 = vsyncadd [#allocation8], %s307
          %s309 = sshll.u32 [#allocation9], 4
          %s310 = int_to_ptr.vmem [resolvable:$true] %s309
          %315 = dma.hbm_to_vmem [thread:$0]  %s4, 1024, %s310, [#allocation8], 256, 256, 16
        $region20: #{value_forward.1} parent=11 // pred_fallthru
          _
        // Predicated region
        $region21: #{value_forward.1} parent=11 // pred_check
          %p316 = pneg %p165
        $region22: #{value_forward.1} parent=11 // pred_check_branch
          %318 = sbr.rel (%p316) target = $region24
        $region23: #{value_forward.1} parent=11 // pred_region
          %s320 = ssub.s32 1024, 1024
          %321 = vsyncadd [#allocation11], %s320
          %s322 = sshll.u32 [#allocation10], 4
          %s323 = int_to_ptr.vmem [resolvable:$true] %s322
          %328 = dma.hbm_to_vmem [thread:$0]  %s5, 1024, %s323, [#allocation11], 256, 256, 16
        $region24: #{value_forward.1} parent=11 // pred_fallthru
          _
        // Predicated region
        $region25: #{value_forward.1} parent=11 // pred_check
          %p329 = pneg %p186
        $region26: #{value_forward.1} parent=11 // pred_check_branch
          %331 = sbr.rel (%p329) target = $region28
        $region27: #{value_forward.1} parent=11 // pred_region
          _
        $region28: #{value_forward.1} parent=11 // pred_fallthru
          _
        // Predicated region
        $region29: #{value_forward.1} parent=11 // pred_check
          %p332 = pneg %p207
        $region30: #{value_forward.1} parent=11 // pred_check_branch
          %334 = sbr.rel (%p332) target = $region32
        $region31: #{value_forward.1} parent=11 // pred_region
          %s336 = ssub.s32 4096, 4096
          %337 = vsyncadd [#allocation11], %s336
          %s338 = sshll.u32 [#allocation12], 4
          %s339 = int_to_ptr.vmem [resolvable:$true] %s338
          %344 = dma.hbm_to_vmem [thread:$0]  %s7, 4096, %s339, [#allocation11], 128, 128, 8
        $region32: #{value_forward.1} parent=11 // pred_fallthru
          _
        // Predicated region
        $region33: #{value_forward.1} parent=11 // pred_check
          %p345 = pneg %p228
        $region34: #{value_forward.1} parent=11 // pred_check_branch
          %347 = sbr.rel (%p345) target = $region36
        $region35: #{value_forward.1} parent=11 // pred_region
          _
        $region36: #{value_forward.1} parent=11 // pred_fallthru
          _
        // Predicated region
        $region37: #{value_forward.1} parent=11 // pred_check
          %p348 = pneg %p249
        $region38: #{value_forward.1} parent=11 // pred_check_branch
          %350 = sbr.rel (%p348) target = $region40
        $region39: #{value_forward.1} parent=11 // pred_region
          _
        $region40: #{value_forward.1} parent=11 // pred_fallthru
          _
      $region12: #{value_forward.1} parent=5 // pred_fallthru
        _
      %p351 = scmp.lt.s32.totalorder %s24, 2
      // Predicated region
      $region41: #{value_forward.1} parent=5 // pred_check
        %p352 = pneg %p351
      $region42: #{value_forward.1} parent=5 // pred_check_branch
        %354 = sbr.rel (%p352) target = $region44
      $region43: #{value_forward.1} parent=5 // pred_region
        // Predicated region
        $region45: #{value_forward.1} parent=43 // pred_check
          %p355 = pneg %p44
        $region46: #{value_forward.1} parent=43 // pred_check_branch
          %357 = sbr.rel (%p355) target = $region48
        $region47: #{value_forward.1} parent=43 // pred_region
          %s358 = sand.u32 %s34, 1
          %s359 = scalar_lea.sflag [#allocation3], %s358
          %s360 = sand.u32 %s34, 1
          %s361 = smul.addr %s360, 8
          %s362 = scalar_lea.vmem [#allocation2], %s361
          %s364 = ssub.s32 128, 128
          %365 = vsyncadd %s359, %s364
          %s366 = smul.addr %s24, 128
          %s367 = scalar_lea.hbm %s0, %s366
          %s369 = sshll.u32 %s362, 4
          %s370 = int_to_ptr.vmem [resolvable:$true] %s369
          %372 = dma.hbm_to_vmem [thread:$0]  %s367, 128, %s370, %s359
        $region48: #{value_forward.1} parent=43 // pred_fallthru
          _
        // Predicated region
        $region49: #{value_forward.1} parent=43 // pred_check
          %p373 = pneg %p70
        $region50: #{value_forward.1} parent=43 // pred_check_branch
          %375 = sbr.rel (%p373) target = $region52
        $region51: #{value_forward.1} parent=43 // pred_region
          %s376 = sand.u32 %s24, 1
          %s377 = scalar_lea.sflag [#allocation5], %s376
          %s378 = sand.u32 %s60, 1
          %s379 = smul.addr %s378, 8
          %s380 = scalar_lea.vmem [#allocation4], %s379
          %s382 = ssub.s32 128, 128
          %383 = vsyncadd %s377, %s382
          %s384 = smul.addr %s24, 128
          %s385 = scalar_lea.hbm %s1, %s384
          %s387 = sshll.u32 %s380, 4
          %s388 = int_to_ptr.vmem [resolvable:$true] %s387
          %390 = dma.hbm_to_vmem [thread:$0]  %s385, 128, %s388, %s377
        $region52: #{value_forward.1} parent=43 // pred_fallthru
          _
        // Predicated region
        $region53: #{value_forward.1} parent=43 // pred_check
          %p391 = pneg %p96
        $region54: #{value_forward.1} parent=43 // pred_check_branch
          %393 = sbr.rel (%p391) target = $region56
        $region55: #{value_forward.1} parent=43 // pred_region
          %s394 = sand.u32 %s24, 1
          %s395 = scalar_lea.sflag [#allocation5], %s394
          %s396 = sand.u32 %s86, 1
          %s397 = smul.addr %s396, 8
          %s398 = scalar_lea.vmem [#allocation6], %s397
          %s400 = ssub.s32 128, 128
          %401 = vsyncadd %s395, %s400
          %s402 = smul.addr %s24, 128
          %s403 = scalar_lea.hbm %s2, %s402
          %s405 = sshll.u32 %s398, 4
          %s406 = int_to_ptr.vmem [resolvable:$true] %s405
          %408 = dma.hbm_to_vmem [thread:$0]  %s403, 128, %s406, %s395
        $region56: #{value_forward.1} parent=43 // pred_fallthru
          _
      $region44: #{value_forward.1} parent=5 // pred_fallthru
        _
      %p409 = scmp.le.s32.totalorder 1, %s24
      %p410 = scmp.lt.s32.totalorder %s24, 3
      %p411 = pnand %p409, %p410
      %p412 = pneg %p411
      // Predicated region
      $region57: #{value_forward.1} parent=5 // pred_check
        _
      $region58: #{value_forward.1} parent=5 // pred_check_branch
        %414 = sbr.rel (%p411) target = $region60
      $region59: #{value_forward.1} parent=5 // pred_region
        %s415 = ssub.s32 %s24, 1
        %s416 = sand.u32 %s37, 1
        %s417 = scalar_lea.sflag [#allocation3], %s416
        %s418 = sand.u32 %s37, 1
        %s419 = smul.addr %s418, 8
        %s420 = scalar_lea.vmem [#allocation2], %s419
        // Predicated region
        $region61: #{value_forward.1} parent=59 // pred_check
          %p421 = pneg %p50
        $region62: #{value_forward.1} parent=59 // pred_check_branch
          %423 = sbr.rel (%p421) target = $region64
        $region63: #{value_forward.1} parent=59 // pred_region
          %424 = dma.done %s417, 128
        $region64: #{value_forward.1} parent=59 // pred_fallthru
          _
        %s425 = sand.u32 %s29, 1
        %s426 = scalar_lea.sflag [#allocation5], %s425
        %s427 = sand.u32 %s63, 1
        %s428 = smul.addr %s427, 8
        %s429 = scalar_lea.vmem [#allocation4], %s428
        // Predicated region
        $region65: #{value_forward.1} parent=59 // pred_check
          %p430 = pneg %p76
        $region66: #{value_forward.1} parent=59 // pred_check_branch
          %432 = sbr.rel (%p430) target = $region68
        $region67: #{value_forward.1} parent=59 // pred_region
          %433 = dma.done %s426, 128
        $region68: #{value_forward.1} parent=59 // pred_fallthru
          _
        %s434 = sand.u32 %s29, 1
        %s435 = scalar_lea.sflag [#allocation5], %s434
        %s436 = sand.u32 %s89, 1
        %s437 = smul.addr %s436, 8
        %s438 = scalar_lea.vmem [#allocation6], %s437
        // Predicated region
        $region69: #{value_forward.1} parent=59 // pred_check
          %p439 = pneg %p102
        $region70: #{value_forward.1} parent=59 // pred_check_branch
          %441 = sbr.rel (%p439) target = $region72
        $region71: #{value_forward.1} parent=59 // pred_region
          %442 = dma.done %s435, 128
        $region72: #{value_forward.1} parent=59 // pred_fallthru
          _
        // Predicated region
        $region73: #{value_forward.1} parent=59 // pred_check
          %p443 = pneg %p123
        $region74: #{value_forward.1} parent=59 // pred_check_branch
          %445 = sbr.rel (%p443) target = $region76
        $region75: #{value_forward.1} parent=59 // pred_region
          %446 = dma.done [#allocation8], 1024
        $region76: #{value_forward.1} parent=59 // pred_fallthru
          _
        // Predicated region
        $region77: #{value_forward.1} parent=59 // pred_check
          %p447 = pneg %p144
        $region78: #{value_forward.1} parent=59 // pred_check_branch
          %449 = sbr.rel (%p447) target = $region80
        $region79: #{value_forward.1} parent=59 // pred_region
          %450 = dma.done [#allocation8], 1024
        $region80: #{value_forward.1} parent=59 // pred_fallthru
          _
        // Predicated region
        $region81: #{value_forward.1} parent=59 // pred_check
          %p451 = pneg %p165
        $region82: #{value_forward.1} parent=59 // pred_check_branch
          %453 = sbr.rel (%p451) target = $region84
        $region83: #{value_forward.1} parent=59 // pred_region
          %454 = dma.done [#allocation11], 1024
        $region84: #{value_forward.1} parent=59 // pred_fallthru
          _
        // Predicated region
        $region85: #{value_forward.1} parent=59 // pred_check
          %p455 = pneg %p207
        $region86: #{value_forward.1} parent=59 // pred_check_branch
          %457 = sbr.rel (%p455) target = $region88
        $region87: #{value_forward.1} parent=59 // pred_region
          %458 = dma.done [#allocation11], 4096
        $region88: #{value_forward.1} parent=59 // pred_fallthru
          _
        %s459 = sand.u32 %s37, 1
        %s460 = scalar_lea.sflag [#allocation3], %s459
        %s461 = sand.u32 %s37, 1
        %s462 = smul.addr %s461, 8
        %s463 = scalar_lea.vmem [#allocation2], %s462
        %p464 = pneg %p50
        %p465 = pneg %p47
        %s466 = sand.u32 %s29, 1
        %s467 = scalar_lea.sflag [#allocation5], %s466
        %s468 = sand.u32 %s63, 1
        %s469 = smul.addr %s468, 8
        %s470 = scalar_lea.vmem [#allocation4], %s469
        %p471 = pneg %p76
        %p472 = pneg %p73
        %s473 = sand.u32 %s29, 1
        %s474 = scalar_lea.sflag [#allocation5], %s473
        %s475 = sand.u32 %s89, 1
        %s476 = smul.addr %s475, 8
        %s477 = scalar_lea.vmem [#allocation6], %s476
        %p478 = pneg %p102
        %p479 = pneg %p99
        %p480 = pneg %p123
        %p481 = pneg %p120
        %p482 = pneg %p144
        %p483 = pneg %p141
        %p484 = pneg %p165
        %p485 = pneg %p162
        %p486 = pneg %p186
        %p487 = pneg %p183
        %p488 = pneg %p207
        %p489 = pneg %p204
        %p490 = pneg %p228
        %p491 = pneg %p225
        %p492 = pneg %p249
        %p493 = pneg %p246
        %p494 = pneg %p275
        %p495 = pneg %p272
        %p496 = scmp.lt.s32.totalorder %s29, 1
        %s497 = scalar_select %p496, %s29, 1
        %s498 = smul.addr %s497, 8
        %s499 = scalar_lea.vmem %s10, %s498
        %p500 = scmp.lt.s32.totalorder %s29, 1
        %s501 = scalar_select %p500, %s29, 1
        %s502 = smul.addr %s501, 8
        %s503 = scalar_lea.vmem %s10, %s502
        %v504 = vld [vmem:[%s420] sm:$0xff]
        %v505 = vld [vmem:[#allocation7] sm:$0xff]
        %v506 = vld [vmem:[#allocation7 + $0x8] sm:$0xff]
        %v507 = vld [vmem:[#allocation7 + $0x10] sm:$0xff]
        %v508 = vld [vmem:[#allocation7 + $0x18] sm:$0xff]
        %v509 = vld [vmem:[#allocation7 + $0x20] sm:$0xff]
        %v510 = vld [vmem:[#allocation7 + $0x28] sm:$0xff]
        %v511 = vld [vmem:[#allocation7 + $0x30] sm:$0xff]
        %v512 = vld [vmem:[#allocation7 + $0x38] sm:$0xff]
        %v513 = vld [vmem:[%s429] sm:$0xff]
        %v514 = vld [vmem:[#allocation9] sm:$0xff]
        %v515 = vld [vmem:[#allocation9 + $0x8] sm:$0xff]
        %v516 = vld [vmem:[#allocation9 + $0x10] sm:$0xff]
        %v517 = vld [vmem:[#allocation9 + $0x18] sm:$0xff]
        %v518 = vld [vmem:[#allocation9 + $0x20] sm:$0xff]
        %v519 = vld [vmem:[#allocation9 + $0x28] sm:$0xff]
        %v520 = vld [vmem:[#allocation9 + $0x30] sm:$0xff]
        %v521 = vld [vmem:[#allocation9 + $0x38] sm:$0xff]
        %vm522 = vcmask 261120
        %v524 = vsel %vm522, %v513, 0
        %526 = vmatprep.subr.mxu0 0.0
        %527 = vmatpush1.msra.mxu0 0.0
        %528 = vmatprep.subr.mxu0 0.0
        %529 = vmatpush1.msra.mxu0 0.0
        %530 = vmatprep.subr.mxu0 0.0
        %531 = vmatpush1.msra.mxu0 0.0
        %532 = vmatprep.subr.mxu0 0.0
        %533 = vmatpush1.msra.mxu0 0.0
        %534 = vmatprep.subr.mxu0 0.0
        %535 = vmatpush1.msra.mxu0 0.0
        %536 = vmatprep.subr.mxu0 0.0
        %537 = vmatpush1.msra.mxu0 0.0
        %538 = vmatprep.subr.mxu0 0.0
        %539 = vmatpush1.msra.mxu0 0.0
        %540 = vmatprep.subr.mxu0 0.0
        %541 = vmatpush1.msra.mxu0 0.0
        %542 = vmatprep.subr.mxu0 0.0
        %543 = vmatpush1.msra.mxu0 0.0
        %544 = vmatprep.subr.mxu0 0.0
        %545 = vmatpush1.msra.mxu0 0.0
        %546 = vmatprep.subr.mxu0 0.0
        %547 = vmatpush1.msra.mxu0 0.0
        %548 = vmatprep.subr.mxu0 0.0
        %549 = vmatpush1.msra.mxu0 0.0
        %550 = vmatprep.subr.mxu0 %v521
        %551 = vmatpush1.msra.mxu0 %v520
        %552 = vmatprep.subr.mxu0 %v519
        %553 = vmatpush1.msra.mxu0 %v518
        %554 = vmatprep.subr.mxu0 %v517
        %555 = vmatpush1.msra.mxu0 %v516
        %556 = vmatprep.subr.mxu0 %v515
        %557 = vmatpush1.msra.mxu0 %v514
        %558 = vmatprep.subr.mxu0 0.0
        %559 = vmatpush2.msra.mxu0 0.0
        %560 = vmatprep.subr.mxu0 0.0
        %561 = vmatpush2.msra.mxu0 0.0
        %562 = vmatprep.subr.mxu0 0.0
        %563 = vmatpush2.msra.mxu0 0.0
        %564 = vmatprep.subr.mxu0 0.0
        %565 = vmatpush2.msra.mxu0 0.0
        %566 = vmatprep.subr.mxu0 0.0
        %567 = vmatpush2.msra.mxu0 0.0
        %568 = vmatprep.subr.mxu0 0.0
        %569 = vmatpush2.msra.mxu0 0.0
        %570 = vmatprep.subr.mxu0 0.0
        %571 = vmatpush2.msra.mxu0 0.0
        %572 = vmatprep.subr.mxu0 0.0
        %573 = vmatpush2.msra.mxu0 0.0
        %574 = vmatprep.subr.mxu0 0.0
        %575 = vmatpush2.msra.mxu0 0.0
        %576 = vmatprep.subr.mxu0 0.0
        %577 = vmatpush2.msra.mxu0 0.0
        %578 = vmatprep.subr.mxu0 0.0
        %579 = vmatpush2.msra.mxu0 0.0
        %580 = vmatprep.subr.mxu0 0.0
        %581 = vmatpush2.msra.mxu0 0.0
        %582 = vmatprep.subr.mxu0 0.0
        %583 = vmatpush2.msra.mxu0 0.0
        %584 = vmatprep.subr.mxu0 0.0
        %585 = vmatpush2.msra.mxu0 0.0
        %586 = vmatprep.subr.mxu0 0.0
        %587 = vmatpush2.msra.mxu0 0.0
        %588 = vmatprep.subr.mxu0 0.0
        %589 = vmatpush2.msra.mxu0 0.0
        %590 = vmatprep.mubr.f32.mxu0 0.0
        %591 = vmatmul.mubr.f32.gmra.mxu0 %v524
        %v592 = vpop.f32.mrf.mxu0
        %v593 = vadd.f32 0.0, %v592
        %v594 = vpop.f32.mrf.mxu0
        %v595 = vadd.f32 0.0, %v594
        %596 = vdwg.mxu0
        %v598 = vsel %vm522, %v504, 0
        %600 = vmatprep.subr.mxu0 0.0
        %601 = vmatpush1.msra.mxu0 0.0
        %602 = vmatprep.subr.mxu0 0.0
        %603 = vmatpush1.msra.mxu0 0.0
        %604 = vmatprep.subr.mxu0 0.0
        %605 = vmatpush1.msra.mxu0 0.0
        %606 = vmatprep.subr.mxu0 0.0
        %607 = vmatpush1.msra.mxu0 0.0
        %608 = vmatprep.subr.mxu0 0.0
        %609 = vmatpush1.msra.mxu0 0.0
        %610 = vmatprep.subr.mxu0 0.0
        %611 = vmatpush1.msra.mxu0 0.0
        %612 = vmatprep.subr.mxu0 0.0
        %613 = vmatpush1.msra.mxu0 0.0
        %614 = vmatprep.subr.mxu0 0.0
        %615 = vmatpush1.msra.mxu0 0.0
        %616 = vmatprep.subr.mxu0 0.0
        %617 = vmatpush1.msra.mxu0 0.0
        %618 = vmatprep.subr.mxu0 0.0
        %619 = vmatpush1.msra.mxu0 0.0
        %620 = vmatprep.subr.mxu0 0.0
        %621 = vmatpush1.msra.mxu0 0.0
        %622 = vmatprep.subr.mxu0 0.0
        %623 = vmatpush1.msra.mxu0 0.0
        %624 = vmatprep.subr.mxu0 %v512
        %625 = vmatpush1.msra.mxu0 %v511
        %626 = vmatprep.subr.mxu0 %v510
        %627 = vmatpush1.msra.mxu0 %v509
        %628 = vmatprep.subr.mxu0 %v508
        %629 = vmatpush1.msra.mxu0 %v507
        %630 = vmatprep.subr.mxu0 %v506
        %631 = vmatpush1.msra.mxu0 %v505
        %632 = vmatprep.subr.mxu0 0.0
        %633 = vmatpush2.msra.mxu0 0.0
        %634 = vmatprep.subr.mxu0 0.0
        %635 = vmatpush2.msra.mxu0 0.0
        %636 = vmatprep.subr.mxu0 0.0
        %637 = vmatpush2.msra.mxu0 0.0
        %638 = vmatprep.subr.mxu0 0.0
        %639 = vmatpush2.msra.mxu0 0.0
        %640 = vmatprep.subr.mxu0 0.0
        %641 = vmatpush2.msra.mxu0 0.0
        %642 = vmatprep.subr.mxu0 0.0
        %643 = vmatpush2.msra.mxu0 0.0
        %644 = vmatprep.subr.mxu0 0.0
        %645 = vmatpush2.msra.mxu0 0.0
        %646 = vmatprep.subr.mxu0 0.0
        %647 = vmatpush2.msra.mxu0 0.0
        %648 = vmatprep.subr.mxu0 0.0
        %649 = vmatpush2.msra.mxu0 0.0
        %650 = vmatprep.subr.mxu0 0.0
        %651 = vmatpush2.msra.mxu0 0.0
        %652 = vmatprep.subr.mxu0 0.0
        %653 = vmatpush2.msra.mxu0 0.0
        %654 = vmatprep.subr.mxu0 0.0
        %655 = vmatpush2.msra.mxu0 0.0
        %656 = vmatprep.subr.mxu0 0.0
        %657 = vmatpush2.msra.mxu0 0.0
        %658 = vmatprep.subr.mxu0 0.0
        %659 = vmatpush2.msra.mxu0 0.0
        %660 = vmatprep.subr.mxu0 0.0
        %661 = vmatpush2.msra.mxu0 0.0
        %662 = vmatprep.subr.mxu0 0.0
        %663 = vmatpush2.msra.mxu0 0.0
        %664 = vmatprep.mubr.f32.mxu0 0.0
        %665 = vmatmul.mubr.f32.gmra.mxu0 %v598
        %v666 = vpop.f32.mrf.mxu0
        %v667 = vadd.f32 %v593, %v666
        %v668 = vpop.f32.mrf.mxu0
        %v669 = vadd.f32 %v595, %v668
        %670 = vdwg.mxu0
        %v671 = vld [vmem:[%s438] sm:$0xff]
        %v672 = vld [vmem:[#allocation10] sm:$0xff]
        %v673 = vld [vmem:[#allocation10 + $0x8] sm:$0xff]
        %v674 = vld [vmem:[#allocation10 + $0x10] sm:$0xff]
        %v675 = vld [vmem:[#allocation10 + $0x18] sm:$0xff]
        %v676 = vld [vmem:[#allocation10 + $0x20] sm:$0xff]
        %v677 = vld [vmem:[#allocation10 + $0x28] sm:$0xff]
        %v678 = vld [vmem:[#allocation10 + $0x30] sm:$0xff]
        %v679 = vld [vmem:[#allocation10 + $0x38] sm:$0xff]
        %v681 = vsel %vm522, %v671, 0
        %683 = vmatprep.subr.mxu0 0.0
        %684 = vmatpush1.msra.mxu0 0.0
        %685 = vmatprep.subr.mxu0 0.0
        %686 = vmatpush1.msra.mxu0 0.0
        %687 = vmatprep.subr.mxu0 0.0
        %688 = vmatpush1.msra.mxu0 0.0
        %689 = vmatprep.subr.mxu0 0.0
        %690 = vmatpush1.msra.mxu0 0.0
        %691 = vmatprep.subr.mxu0 0.0
        %692 = vmatpush1.msra.mxu0 0.0
        %693 = vmatprep.subr.mxu0 0.0
        %694 = vmatpush1.msra.mxu0 0.0
        %695 = vmatprep.subr.mxu0 0.0
        %696 = vmatpush1.msra.mxu0 0.0
        %697 = vmatprep.subr.mxu0 0.0
        %698 = vmatpush1.msra.mxu0 0.0
        %699 = vmatprep.subr.mxu0 0.0
        %700 = vmatpush1.msra.mxu0 0.0
        %701 = vmatprep.subr.mxu0 0.0
        %702 = vmatpush1.msra.mxu0 0.0
        %703 = vmatprep.subr.mxu0 0.0
        %704 = vmatpush1.msra.mxu0 0.0
        %705 = vmatprep.subr.mxu0 0.0
        %706 = vmatpush1.msra.mxu0 0.0
        %707 = vmatprep.subr.mxu0 %v679
        %708 = vmatpush1.msra.mxu0 %v678
        %709 = vmatprep.subr.mxu0 %v677
        %710 = vmatpush1.msra.mxu0 %v676
        %711 = vmatprep.subr.mxu0 %v675
        %712 = vmatpush1.msra.mxu0 %v674
        %713 = vmatprep.subr.mxu0 %v673
        %714 = vmatpush1.msra.mxu0 %v672
        %715 = vmatprep.subr.mxu0 0.0
        %716 = vmatpush2.msra.mxu0 0.0
        %717 = vmatprep.subr.mxu0 0.0
        %718 = vmatpush2.msra.mxu0 0.0
        %719 = vmatprep.subr.mxu0 0.0
        %720 = vmatpush2.msra.mxu0 0.0
        %721 = vmatprep.subr.mxu0 0.0
        %722 = vmatpush2.msra.mxu0 0.0
        %723 = vmatprep.subr.mxu0 0.0
        %724 = vmatpush2.msra.mxu0 0.0
        %725 = vmatprep.subr.mxu0 0.0
        %726 = vmatpush2.msra.mxu0 0.0
        %727 = vmatprep.subr.mxu0 0.0
        %728 = vmatpush2.msra.mxu0 0.0
        %729 = vmatprep.subr.mxu0 0.0
        %730 = vmatpush2.msra.mxu0 0.0
        %731 = vmatprep.subr.mxu0 0.0
        %732 = vmatpush2.msra.mxu0 0.0
        %733 = vmatprep.subr.mxu0 0.0
        %734 = vmatpush2.msra.mxu0 0.0
        %735 = vmatprep.subr.mxu0 0.0
        %736 = vmatpush2.msra.mxu0 0.0
        %737 = vmatprep.subr.mxu0 0.0
        %738 = vmatpush2.msra.mxu0 0.0
        %739 = vmatprep.subr.mxu0 0.0
        %740 = vmatpush2.msra.mxu0 0.0
        %741 = vmatprep.subr.mxu0 0.0
        %742 = vmatpush2.msra.mxu0 0.0
        %743 = vmatprep.subr.mxu0 0.0
        %744 = vmatpush2.msra.mxu0 0.0
        %745 = vmatprep.subr.mxu0 0.0
        %746 = vmatpush2.msra.mxu0 0.0
        %747 = vmatprep.mubr.f32.mxu0 0.0
        %748 = vmatmul.mubr.f32.gmra.mxu0 %v681
        %v749 = vpop.f32.mrf.mxu0
        %v750 = vadd.f32 0.0, %v749
        %v751 = vpop.f32.mrf.mxu0
        %v752 = vadd.f32 0.0, %v751
        %753 = vdwg.mxu0
        %v754 = vadd.f32 %v667, %v750
        %v755 = vadd.f32 %v669, %v752
        %v756 = vld [vmem:[%s6] sm:$0x3]
        %v758 = vlaneseq
        %v759 = vshrl.u32 %v758, 7
        %v760 = vsub.s32 0, %v759
        %v761 = vrot.slane %v756, %v760
        %v762 = vlaneseq
        %v763 = vshrl.u32 %v762, 7
        %v764 = vsub.s32 1, %v763
        %v765 = vrot.slane %v756, %v764
        %v768 = vadd.f32 %v754, %v761
        %v769 = vadd.f32 %v755, %v765
        %v770 = vld [vmem:[#allocation12] sm:$0xff]
        %v771 = vld [vmem:[#allocation12 + $0x8] sm:$0xff]
        %v772 = vld [vmem:[#allocation12 + $0x10] sm:$0xff]
        %v773 = vld [vmem:[#allocation12 + $0x18] sm:$0xff]
        %v774 = vld [vmem:[#allocation12 + $0x20] sm:$0xff]
        %v775 = vld [vmem:[#allocation12 + $0x28] sm:$0xff]
        %v776 = vld [vmem:[#allocation12 + $0x30] sm:$0xff]
        %v777 = vld [vmem:[#allocation12 + $0x38] sm:$0xff]
        %v778 = vld [vmem:[#allocation12 + $0x40] sm:$0xff]
        %v779 = vld [vmem:[#allocation12 + $0x48] sm:$0xff]
        %v780 = vld [vmem:[#allocation12 + $0x50] sm:$0xff]
        %v781 = vld [vmem:[#allocation12 + $0x58] sm:$0xff]
        %v782 = vld [vmem:[#allocation12 + $0x60] sm:$0xff]
        %v783 = vld [vmem:[#allocation12 + $0x68] sm:$0xff]
        %v784 = vld [vmem:[#allocation12 + $0x70] sm:$0xff]
        %v785 = vld [vmem:[#allocation12 + $0x78] sm:$0xff]
        %v786 = vld [vmem:[#allocation12 + $0x80] sm:$0xff]
        %v787 = vld [vmem:[#allocation12 + $0x88] sm:$0xff]
        %v788 = vld [vmem:[#allocation12 + $0x90] sm:$0xff]
        %v789 = vld [vmem:[#allocation12 + $0x98] sm:$0xff]
        %v790 = vld [vmem:[#allocation12 + $0xa0] sm:$0xff]
        %v791 = vld [vmem:[#allocation12 + $0xa8] sm:$0xff]
        %v792 = vld [vmem:[#allocation12 + $0xb0] sm:$0xff]
        %v793 = vld [vmem:[#allocation12 + $0xb8] sm:$0xff]
        %v794 = vld [vmem:[#allocation12 + $0xc0] sm:$0xff]
        %v795 = vld [vmem:[#allocation12 + $0xc8] sm:$0xff]
        %v796 = vld [vmem:[#allocation12 + $0xd0] sm:$0xff]
        %v797 = vld [vmem:[#allocation12 + $0xd8] sm:$0xff]
        %v798 = vld [vmem:[#allocation12 + $0xe0] sm:$0xff]
        %v799 = vld [vmem:[#allocation12 + $0xe8] sm:$0xff]
        %v800 = vld [vmem:[#allocation12 + $0xf0] sm:$0xff]
        %v801 = vld [vmem:[#allocation12 + $0xf8] sm:$0xff]
        %v802 = vld [vmem:[%s8] sm:$0x1]
        %v804 = vlaneseq
        %v805 = vshrl.u32 %v804, 7
        %v806 = vsub.s32 0, %v805
        %v807 = vrot.slane %v802, %v806
        %809 = vmatprep.subr.mxu0 0.0
        %810 = vmatpush1.msra.mxu0 %v785
        %811 = vmatprep.subr.mxu0 0.0
        %812 = vmatpush1.msra.mxu0 %v784
        %813 = vmatprep.subr.mxu0 0.0
        %814 = vmatpush1.msra.mxu0 %v783
        %815 = vmatprep.subr.mxu0 0.0
        %816 = vmatpush1.msra.mxu0 %v782
        %817 = vmatprep.subr.mxu0 0.0
        %818 = vmatpush1.msra.mxu0 %v781
        %819 = vmatprep.subr.mxu0 0.0
        %820 = vmatpush1.msra.mxu0 %v780
        %821 = vmatprep.subr.mxu0 0.0
        %822 = vmatpush1.msra.mxu0 %v779
        %823 = vmatprep.subr.mxu0 0.0
        %824 = vmatpush1.msra.mxu0 %v778
        %825 = vmatprep.subr.mxu0 0.0
        %826 = vmatpush1.msra.mxu0 %v777
        %827 = vmatprep.subr.mxu0 0.0
        %828 = vmatpush1.msra.mxu0 %v776
        %829 = vmatprep.subr.mxu0 0.0
        %830 = vmatpush1.msra.mxu0 %v775
        %831 = vmatprep.subr.mxu0 0.0
        %832 = vmatpush1.msra.mxu0 %v774
        %833 = vmatprep.subr.mxu0 0.0
        %834 = vmatpush1.msra.mxu0 %v773
        %835 = vmatprep.subr.mxu0 0.0
        %836 = vmatpush1.msra.mxu0 %v772
        %837 = vmatprep.subr.mxu0 0.0
        %838 = vmatpush1.msra.mxu0 %v771
        %839 = vmatprep.subr.mxu0 0.0
        %840 = vmatpush1.msra.mxu0 %v770
        %841 = vmatprep.subr.mxu0 0.0
        %842 = vmatpush2.msra.mxu0 %v801
        %843 = vmatprep.subr.mxu0 0.0
        %844 = vmatpush2.msra.mxu0 %v800
        %845 = vmatprep.subr.mxu0 0.0
        %846 = vmatpush2.msra.mxu0 %v799
        %847 = vmatprep.subr.mxu0 0.0
        %848 = vmatpush2.msra.mxu0 %v798
        %849 = vmatprep.subr.mxu0 0.0
        %850 = vmatpush2.msra.mxu0 %v797
        %851 = vmatprep.subr.mxu0 0.0
        %852 = vmatpush2.msra.mxu0 %v796
        %853 = vmatprep.subr.mxu0 0.0
        %854 = vmatpush2.msra.mxu0 %v795
        %855 = vmatprep.subr.mxu0 0.0
        %856 = vmatpush2.msra.mxu0 %v794
        %857 = vmatprep.subr.mxu0 0.0
        %858 = vmatpush2.msra.mxu0 %v793
        %859 = vmatprep.subr.mxu0 0.0
        %860 = vmatpush2.msra.mxu0 %v792
        %861 = vmatprep.subr.mxu0 0.0
        %862 = vmatpush2.msra.mxu0 %v791
        %863 = vmatprep.subr.mxu0 0.0
        %864 = vmatpush2.msra.mxu0 %v790
        %865 = vmatprep.subr.mxu0 0.0
        %866 = vmatpush2.msra.mxu0 %v789
        %867 = vmatprep.subr.mxu0 0.0
        %868 = vmatpush2.msra.mxu0 %v788
        %869 = vmatprep.subr.mxu0 0.0
        %870 = vmatpush2.msra.mxu0 %v787
        %871 = vmatprep.subr.mxu0 0.0
        %872 = vmatpush2.msra.mxu0 %v786
        %873 = vmatprep.mubr.f32.mxu0 %v769
        %874 = vmatmul.mubr.f32.gmra.mxu0 %v768
        %v875 = vpop.f32.mrf.mxu0
        %v876 = vadd.f32 %v807, %v875
        %v877 = vpop.f32.mrf.mxu0
        %878 = vdwg.mxu0
        %v879 = vmax.f32 %v876, 0.0
        %v880 = vld [vmem:[%s9] sm:$0x1]
        %v882 = vlaneseq
        %v883 = vshrl.u32 %v882, 7
        %v884 = vsub.s32 0, %v883
        %v885 = vrot.slane %v880, %v884
        %v887 = vmul.f32 %v879, %v885
        %888 = vadd.xlane.f32.xlu0 %v887
        %v889 = vpop.xlane.xlu0 %888
        %v890 = vmax.f32 %v889, 0.0
        %v891 = vxor.u32 %v890, 2147483648
        %v892 = vmul.f32 %v891, 1.442695
        %v893 = vpow.pop %v892
        %v894 = vadd.f32 %v893, 1.0
        %v895 = vrcp.pop %v894
        %v896 = vmul.f32 1.0, %v895
        %897 = vst [vmem:[%s503] sm:$0xff] %v896
        %p898 = scmp.lt.s32.totalorder %s29, 1
        %s899 = scalar_select %p898, %s29, 1
        %s900 = smul.addr %s899, 8
        %s901 = scalar_lea.vmem %s10, %s900
        // Predicated region
        $region89: #{value_forward.1} parent=59 // pred_check
          %p902 = pneg %p272
        $region90: #{value_forward.1} parent=59 // pred_check_branch
          %904 = sbr.rel (%p902) target = $region92
        $region91: #{value_forward.1} parent=59 // pred_region
          _
        $region92: #{value_forward.1} parent=59 // pred_fallthru
          _
      $region60: #{value_forward.1} parent=5 // pred_fallthru
        _
      %p905 = scmp.le.s32.totalorder 2, %s24
      // Predicated region
      $region93: #{value_forward.1} parent=5 // pred_check
        %p906 = pneg %p905
      $region94: #{value_forward.1} parent=5 // pred_check_branch
        %908 = sbr.rel (%p906) target = $region96
      $region95: #{value_forward.1} parent=5 // pred_region
        %s909 = ssub.s32 %s24, 2
        // Predicated region
        $region97: #{value_forward.1} parent=95 // pred_check
          %p910 = pneg %p278
        $region98: #{value_forward.1} parent=95 // pred_check_branch
          %912 = sbr.rel (%p910) target = $region100
        $region99: #{value_forward.1} parent=95 // pred_region
          %p913 = scmp.lt.s32.totalorder %s30, 1
          %s914 = scalar_select %p913, %s30, 1
          %s915 = smul.addr %s914, 8
          %s916 = scalar_lea.vmem %s10, %s915
        $region100: #{value_forward.1} parent=95 // pred_fallthru
          _
      $region96: #{value_forward.1} parent=5 // pred_fallthru
        _
    $region6: #{value_forward.1} parent=1 // loop_footer
      %s28 = sadd.s32 1, %s24
    $region7: #{value_forward.1} parent=1 // loop_footer_branch
      %23 = sbr.rel target = $region3
    $region8: #{value_forward.1} parent=1 // loop_exit
      _
    %917 = vsyncpa [#allocation3], 1
    %s918 = scalar_lea.sflag [#allocation3], 1
    %919 = vsyncpa %s918, 1
    %920 = vsyncpa [#allocation5], 1
    %s921 = scalar_lea.sflag [#allocation5], 1
    %922 = vsyncpa %s921, 1
    %923 = vsyncpa [#allocation8], 1
    %924 = vsyncpa [#allocation11], 1

</llo_original>
